<compile_context>
chip_gen: v6e
topology: v6e:2x2x1
jax: 0.10.0
libtpu: 0.0.40
codegen_flags: <defaults>
</compile_context>

<pallas_src>
import functools
import math

import jax
import jax.numpy as jnp
from jax.experimental import pallas as pl
from jax.experimental.pallas import tpu as pltpu

LN_EPS = 1e-5  # torch.nn.LayerNorm default eps


def _erf(x):
    # Abramowitz & Stegun 7.1.26 polynomial (|abs err| < 1.5e-7); built only
    # from exp / mul / add, which the VPU + EUP support natively.
    a1, a2, a3, a4, a5 = (0.254829592, -0.284496736, 1.421413741,
                          -1.453152027, 1.061405429)
    p = 0.3275911
    sgn = jnp.where(x >= 0.0, 1.0, -1.0)
    ax = jnp.abs(x)
    t = 1.0 / (1.0 + p * ax)
    poly = ((((a5 * t + a4) * t + a3) * t + a2) * t + a1) * t
    return sgn * (1.0 - poly * jnp.exp(-ax * ax))


def _gelu_exact(x):
    # nn.GELU() default = exact (erf-based) GELU.
    return 0.5 * x * (1.0 + _erf(x * (1.0 / math.sqrt(2.0))))


def _layernorm(x, gamma, beta):
    mu = jnp.mean(x, axis=-1, keepdims=True)
    var = jnp.mean(jnp.square(x - mu), axis=-1, keepdims=True)
    return (x - mu) * jax.lax.rsqrt(var + LN_EPS) * gamma + beta


def query_model_kernel(ft_ref, sd_ref,
                       g1_ref, bt1_ref, w1_ref, bi1_ref,
                       g2_ref, bt2_ref, w2_ref, bi2_ref,
                       attw_ref, attft_ref,
                       *, inv_scale, mxu_dtype):
    BB, T, F = ft_ref.shape
    N, S = sd_ref.shape

    # Flatten the batch block so both MLP matmuls and the q@sd^T run once per
    # grid step with a BB*T-row M dim (better MXU fill, fewer grid steps).
    x = ft_ref[...].reshape(BB * T, F)              # (BB*T, F)
    sd = sd_ref[...]                                # (N, S), f32
    sd_m = sd.astype(mxu_dtype)

    # ---- q_map: LN -> Linear -> GELU -> LN -> Linear ----
    # Elementwise math in f32; MXU operands downcast to mxu_dtype with f32 acc.
    h = _layernorm(x, g1_ref[...], bt1_ref[...])
    h = jnp.dot(h.astype(mxu_dtype), w1_ref[...].astype(mxu_dtype),
                preferred_element_type=jnp.float32) + bi1_ref[...]
    h = _gelu_exact(h)
    h = _layernorm(h, g2_ref[...], bt2_ref[...])
    q = jnp.dot(h.astype(mxu_dtype), w2_ref[...].astype(mxu_dtype),
                preferred_element_type=jnp.float32) + bi2_ref[...]   # (BB*T, S)

    # ---- attention logits against the FDT dictionary ----
    # inner[r, n] = <q[r], sd[n]> ; both scalar scales fused into one constant.
    inner = jax.lax.dot_general(q.astype(mxu_dtype), sd_m,
                                (((1,), (1,)), ((), ())),
                                preferred_element_type=jnp.float32)  # (BB*T, N)
    inner = inner * inv_scale
    # TODO(synk): padded-token mask path (mask is None in the default forward).

    # ---- pool over tokens (pool_type='max') ----
    z = jnp.max(inner.reshape(BB, T, N), axis=1)    # (BB, N)

    # ---- sparsemax over last dim, vectorized over the BB rows (sort-free) ----
    # For each row b, element i: k_i = #{j : z_j >= z_i}, s_i = sum of those z_j.
    # i is in the support iff 1 + k_i*z_i > s_i; tau = max over valid i of
    # (s_i - 1)/k_i (identical to the sort-based definition, ties included).
    ge = (z[:, None, :] >= z[:, :, None]).astype(jnp.float32)   # (BB, N, N)
    k_i = jnp.sum(ge, axis=-1)                       # (BB, N)
    s_i = jnp.sum(ge * z[:, None, :], axis=-1)       # (BB, N)
    valid = (1.0 + k_i * z) > s_i                    # (BB, N)
    tau_cand = (s_i - 1.0) / k_i                     # (BB, N)
    tau = jnp.max(jnp.where(valid, tau_cand, -jnp.inf),
                  axis=-1, keepdims=True)            # (BB, 1)
    att_w = jnp.maximum(z - tau, 0.0)                # (BB, N)

    # ---- attend over FDT ----
    att_ft = jnp.dot(att_w.astype(mxu_dtype), sd_m,
                     preferred_element_type=jnp.float32)   # (BB, S)

    attw_ref[...] = att_w
    attft_ref[...] = att_ft


def query_model_forward(ft, sd, params, temperature=1.0, block_b=None,
                        mxu_dtype=jnp.bfloat16):
    B, T, F = ft.shape
    N, S = sd.shape
    g1, bt1, w1, bi1, g2, bt2, w2, bi2 = params

    # ---- choose the batch block (BB rows per grid step) ----
    if block_b is None:
        block_b = min(B, 64)
    # Keep the second-minor dim of the (BB, N)/(BB, S) output tiles 8-sublane
    # aligned whenever the grid has more than one step.
    if block_b < B and block_b % 8 != 0:
        block_b = ((block_b + 7) // 8) * 8
    num_blocks = pl.cdiv(B, block_b)
    b_pad = num_blocks * block_b
    if b_pad != B:
        ft = jnp.pad(ft, ((0, b_pad - B), (0, 0), (0, 0)))

    inv_scale = 1.0 / (math.sqrt(float(S)) * float(temperature))
    kernel = functools.partial(query_model_kernel, inv_scale=inv_scale,
                               mxu_dtype=mxu_dtype)

    def _full(shape):
        zeros = (0,) * len(shape)
        return pl.BlockSpec(shape, lambda b, _z=zeros: _z)

    # NOTE(perf): if F/S ever scale up (v7x has only 64 MiB VMEM), add
    # pipeline_mode=pl.Buffered(1) to the weight BlockSpecs below to stop
    # double-buffering the grid-invariant weights.
    att_w, att_ft = pl.pallas_call(
        kernel,
        out_shape=(jax.ShapeDtypeStruct((b_pad, N), jnp.float32),
                   jax.ShapeDtypeStruct((b_pad, S), jnp.float32)),
        grid=(num_blocks,),
        in_specs=[
            pl.BlockSpec((block_b, T, F), lambda b: (b, 0, 0)),  # ft block
            _full((N, S)),                                       # sd (FDT dict)
            _full((1, F)), _full((1, F)),                        # LN1 gamma/beta
            _full((F, S)), _full((1, S)),                        # Linear1 W/b
            _full((1, S)), _full((1, S)),                        # LN2 gamma/beta
            _full((S, S)), _full((1, S)),                        # Linear2 W/b
        ],
        out_specs=(pl.BlockSpec((block_b, N), lambda b: (b, 0)),
                   pl.BlockSpec((block_b, S), lambda b: (b, 0))),
        compiler_params=pltpu.CompilerParams(dimension_semantics=("parallel",)),
    )(ft, sd, g1, bt1, w1, bi1, g2, bt2, w2, bi2)

    return att_w[:B], att_ft[:B]


# ------------------------ pure-JAX reference ------------------------
def reference_forward(ft, sd, params, temperature=1.0, mxu_dtype=jnp.float32):
    """Reference forward. With mxu_dtype=bf16 it models a bf16-operand MXU
    (f32 accumulation), mirroring the kernel's default matmul precision."""
    g1, bt1, w1, bi1, g2, bt2, w2, bi2 = params

    def mm(a, b):
        return jnp.dot(a.astype(mxu_dtype), b.astype(mxu_dtype),
                       preferred_element_type=jnp.float32)

    def ln(x, g, b):
        mu = x.mean(-1, keepdims=True)
        var = ((x - mu) ** 2).mean(-1, keepdims=True)
        return (x - mu) / jnp.sqrt(var + LN_EPS) * g + b

    h = ln(ft, g1[0], bt1[0])
    h = mm(h, w1) + bi1[0]
    h = jax.nn.gelu(h, approximate=False)
    h = ln(h, g2[0], bt2[0])
    q = mm(h, w2) + bi2[0]
    inner = jnp.einsum('btd,nd->btn', q.astype(mxu_dtype), sd.astype(mxu_dtype),
                       preferred_element_type=jnp.float32)
    inner = inner / math.sqrt(sd.shape[1]) / temperature
    z = inner.max(axis=1)                                # (B, N)
    # sparsemax (sort-based, matches the PyTorch Sparsemax module)
    zs = jnp.sort(z, axis=-1)[:, ::-1]
    rng = jnp.arange(1, z.shape[-1] + 1, dtype=z.dtype)[None, :]
    cs = jnp.cumsum(zs, axis=-1)
    is_gt = (1.0 + rng * zs) > cs
    k = jnp.max(jnp.where(is_gt, rng, 0.0), axis=-1, keepdims=True)
    s = jnp.sum(jnp.where(is_gt, zs, 0.0), axis=-1, keepdims=True)
    tau = (s - 1.0) / k
    att_w = jnp.maximum(z - tau, 0.0)
    att_ft = mm(att_w, sd)
    return att_w, att_ft


if __name__ == "__main__":
    # Small shapes consistent with the module: batch=2, token_num=8,
    # ft_dim=32, sd_dim=32, FDT_num=16.
    B, T, F, S, N = 2, 8, 32, 32, 16

    key = jax.random.PRNGKey(0)
    ks = jax.random.split(key, 10)
    ft = jax.random.normal(ks[0], (B, T, F), jnp.float32)
    sd = jax.random.normal(ks[1], (N, S), jnp.float32)

    g1 = 1.0 + 0.05 * jax.random.normal(ks[2], (1, F), jnp.float32)
    bt1 = 0.05 * jax.random.normal(ks[3], (1, F), jnp.float32)
    w1 = 0.2 * jax.random.normal(ks[4], (F, S), jnp.float32)
    bi1 = 0.05 * jax.random.normal(ks[5], (1, S), jnp.float32)
    g2 = 1.0 + 0.05 * jax.random.normal(ks[6], (1, S), jnp.float32)
    bt2 = 0.05 * jax.random.normal(ks[7], (1, S), jnp.float32)
    w2 = 0.2 * jax.random.normal(ks[8], (S, S), jnp.float32)
    bi2 = 0.05 * jax.random.normal(ks[9], (1, S), jnp.float32)
    params = (g1, bt1, w1, bi1, g2, bt2, w2, bi2)

    # 1) Default path: bf16 MXU operands + f32 accumulation (perf-review item).
    #    Compared against a reference that models the same MXU precision, so
    #    the remaining error is only erf-poly / rsqrt level (<<5e-3).
    att_w, att_ft = query_model_forward(ft, sd, params, temperature=1.0)
    jax.block_until_ready((att_w, att_ft))
    rw, rf = reference_forward(ft, sd, params, temperature=1.0,
                               mxu_dtype=jnp.bfloat16)
    assert att_w.shape == (B, N) and att_ft.shape == (B, S)
    assert jnp.allclose(att_w, rw, atol=5e-3, rtol=5e-3), "att_weight mismatch (bf16)"
    assert jnp.allclose(att_ft, rf, atol=5e-3, rtol=5e-3), "att_ft mismatch (bf16)"

    # 2) Full-f32 MXU path matches the plain f32 reference tightly.
    att_w32, att_ft32 = query_model_forward(ft, sd, params, temperature=1.0,
                                            mxu_dtype=jnp.float32)
    rw32, rf32 = reference_forward(ft, sd, params, temperature=1.0)
    jax.block_until_ready((att_w32, att_ft32))
    assert jnp.allclose(att_w32, rw32, atol=2e-3, rtol=2e-3), "att_weight mismatch (f32)"
    assert jnp.allclose(att_ft32, rf32, atol=2e-3, rtol=2e-3), "att_ft mismatch (f32)"

    # 3) Ragged batch: exercises the multi-step grid + batch padding path.
    B2 = 20
    ft2 = jax.random.normal(jax.random.PRNGKey(1), (B2, T, F), jnp.float32)
    aw2, af2 = query_model_forward(ft2, sd, params, temperature=1.0, block_b=8)
    jax.block_until_ready((aw2, af2))
    rw2, rf2 = reference_forward(ft2, sd, params, temperature=1.0,
                                 mxu_dtype=jnp.bfloat16)
    assert aw2.shape == (B2, N) and af2.shape == (B2, S)
    assert jnp.allclose(aw2, rw2, atol=5e-3, rtol=5e-3), "att_weight mismatch (ragged)"
    assert jnp.allclose(af2, rf2, atol=5e-3, rtol=5e-3), "att_ft mismatch (ragged)"

    print("KERNEL_OK")
</pallas_src>

<mosaic_0001>
module attributes {stable_mosaic.version = 11 : i64} {
  func.func @query_model_kernel(%arg0: i32, %arg1: memref<2x8x32xf32, #tpu.memory_space<vmem>>, %arg2: memref<16x32xf32, #tpu.memory_space<vmem>>, %arg3: memref<1x32xf32, #tpu.memory_space<vmem>>, %arg4: memref<1x32xf32, #tpu.memory_space<vmem>>, %arg5: memref<32x32xf32, #tpu.memory_space<vmem>>, %arg6: memref<1x32xf32, #tpu.memory_space<vmem>>, %arg7: memref<1x32xf32, #tpu.memory_space<vmem>>, %arg8: memref<1x32xf32, #tpu.memory_space<vmem>>, %arg9: memref<32x32xf32, #tpu.memory_space<vmem>>, %arg10: memref<1x32xf32, #tpu.memory_space<vmem>>, %arg11: memref<2x16xf32, #tpu.memory_space<vmem>>, %arg12: memref<2x32xf32, #tpu.memory_space<vmem>>) attributes {dimension_semantics = [#tpu.dimension_semantics<parallel>], iteration_bounds = array<i64: 1>, scalar_prefetch = 0 : i64, scratch_operands = 0 : i64, tpu.core_type = #tpu.core_type<tc>, window_params = [{transform_indices = @transform_0, window_bounds = array<i64: 2, 8, 32>}, {pipeline_mode = #tpu.pipeline_mode<synchronous>, transform_indices = @transform_1, window_bounds = array<i64: 16, 32>}, {pipeline_mode = #tpu.pipeline_mode<synchronous>, transform_indices = @transform_2, window_bounds = array<i64: 1, 32>}, {pipeline_mode = #tpu.pipeline_mode<synchronous>, transform_indices = @transform_3, window_bounds = array<i64: 1, 32>}, {pipeline_mode = #tpu.pipeline_mode<synchronous>, transform_indices = @transform_4, window_bounds = array<i64: 32, 32>}, {pipeline_mode = #tpu.pipeline_mode<synchronous>, transform_indices = @transform_5, window_bounds = array<i64: 1, 32>}, {pipeline_mode = #tpu.pipeline_mode<synchronous>, transform_indices = @transform_6, window_bounds = array<i64: 1, 32>}, {pipeline_mode = #tpu.pipeline_mode<synchronous>, transform_indices = @transform_7, window_bounds = array<i64: 1, 32>}, {pipeline_mode = #tpu.pipeline_mode<synchronous>, transform_indices = @transform_8, window_bounds = array<i64: 32, 32>}, {pipeline_mode = #tpu.pipeline_mode<synchronous>, transform_indices = @transform_9, window_bounds = array<i64: 1, 32>}, {transform_indices = @transform_10, window_bounds = array<i64: 2, 16>}, {transform_indices = @transform_11, window_bounds = array<i64: 2, 32>}]} {
    %c0 = arith.constant 0 : index
    %c0_0 = arith.constant 0 : index
    %c0_1 = arith.constant 0 : index
    %0 = vector.load %arg1[%c0, %c0_0, %c0_1] : memref<2x8x32xf32, #tpu.memory_space<vmem>>, vector<2x8x32xf32>
    %1 = vector.shape_cast %0 : vector<2x8x32xf32> to vector<16x32xf32>
    %c0_2 = arith.constant 0 : index
    %c0_3 = arith.constant 0 : index
    %2 = vector.load %arg2[%c0_2, %c0_3] : memref<16x32xf32, #tpu.memory_space<vmem>>, vector<16x32xf32>
    %3 = arith.truncf %2 : vector<16x32xf32> to vector<16x32xbf16>
    %c0_4 = arith.constant 0 : index
    %c0_5 = arith.constant 0 : index
    %4 = vector.load %arg3[%c0_4, %c0_5] : memref<1x32xf32, #tpu.memory_space<vmem>>, vector<1x32xf32>
    %c0_6 = arith.constant 0 : index
    %c0_7 = arith.constant 0 : index
    %5 = vector.load %arg4[%c0_6, %c0_7] : memref<1x32xf32, #tpu.memory_space<vmem>>, vector<1x32xf32>
    %cst = arith.constant dense<0.000000e+00> : vector<16xf32>
    %6 = vector.multi_reduction <add>, %1, %cst [1] : vector<16x32xf32> to vector<16xf32>
    %7 = vector.shape_cast %6 : vector<16xf32> to vector<16x1xf32>
    %cst_8 = arith.constant 3.200000e+01 : f32
    %8 = vector.broadcast %cst_8 : f32 to vector<16x1xf32>
    %9 = arith.divf %7, %8 : vector<16x1xf32>
    %10 = vector.broadcast %9 : vector<16x1xf32> to vector<16x32xf32>
    %11 = arith.subf %1, %10 : vector<16x32xf32>
    %12 = arith.mulf %11, %11 : vector<16x32xf32>
    %cst_9 = arith.constant dense<0.000000e+00> : vector<16xf32>
    %13 = vector.multi_reduction <add>, %12, %cst_9 [1] : vector<16x32xf32> to vector<16xf32>
    %14 = vector.shape_cast %13 : vector<16xf32> to vector<16x1xf32>
    %cst_10 = arith.constant 3.200000e+01 : f32
    %15 = vector.broadcast %cst_10 : f32 to vector<16x1xf32>
    %16 = arith.divf %14, %15 : vector<16x1xf32>
    %17 = vector.broadcast %9 : vector<16x1xf32> to vector<16x32xf32>
    %18 = arith.subf %1, %17 : vector<16x32xf32>
    %cst_11 = arith.constant 9.99999974E-6 : f32
    %19 = vector.broadcast %cst_11 : f32 to vector<16x1xf32>
    %20 = arith.addf %16, %19 : vector<16x1xf32>
    %21 = math.rsqrt %20 : vector<16x1xf32>
    %22 = vector.broadcast %21 : vector<16x1xf32> to vector<16x32xf32>
    %23 = arith.mulf %18, %22 : vector<16x32xf32>
    %24 = vector.broadcast %4 : vector<1x32xf32> to vector<16x32xf32>
    %25 = arith.mulf %23, %24 : vector<16x32xf32>
    %26 = vector.broadcast %5 : vector<1x32xf32> to vector<16x32xf32>
    %27 = arith.addf %25, %26 : vector<16x32xf32>
    %28 = arith.truncf %27 : vector<16x32xf32> to vector<16x32xbf16>
    %c0_12 = arith.constant 0 : index
    %c0_13 = arith.constant 0 : index
    %29 = vector.load %arg5[%c0_12, %c0_13] : memref<32x32xf32, #tpu.memory_space<vmem>>, vector<32x32xf32>
    %30 = arith.truncf %29 : vector<32x32xf32> to vector<32x32xbf16>
    %cst_14 = arith.constant dense<0.000000e+00> : vector<16x32xf32>
    %31 = tpu.matmul %28, %30, %cst_14 {dimension_numbers = #tpu.dot_dimension_numbers<[1], [0], [0], [1], [0, 0, 1, 1], [], []>} : vector<16x32xbf16>, vector<32x32xbf16>, vector<16x32xf32> -> vector<16x32xf32>
    %c0_15 = arith.constant 0 : index
    %c0_16 = arith.constant 0 : index
    %32 = vector.load %arg6[%c0_15, %c0_16] : memref<1x32xf32, #tpu.memory_space<vmem>>, vector<1x32xf32>
    %33 = vector.broadcast %32 : vector<1x32xf32> to vector<16x32xf32>
    %34 = arith.addf %31, %33 : vector<16x32xf32>
    %cst_17 = arith.constant 5.000000e-01 : f32
    %35 = vector.broadcast %cst_17 : f32 to vector<16x32xf32>
    %36 = arith.mulf %35, %34 : vector<16x32xf32>
    %cst_18 = arith.constant 0.707106769 : f32
    %37 = vector.broadcast %cst_18 : f32 to vector<16x32xf32>
    %38 = arith.mulf %34, %37 : vector<16x32xf32>
    %cst_19 = arith.constant 0.000000e+00 : f32
    %39 = vector.broadcast %cst_19 : f32 to vector<16x32xf32>
    %40 = arith.cmpf oge, %38, %39 : vector<16x32xf32>
    %cst_20 = arith.constant 1.000000e+00 : f32
    %cst_21 = arith.constant -1.000000e+00 : f32
    %41 = vector.broadcast %cst_20 : f32 to vector<16x32xf32>
    %42 = vector.broadcast %cst_21 : f32 to vector<16x32xf32>
    %43 = arith.select %40, %41, %42 : vector<16x32xi1>, vector<16x32xf32>
    %44 = math.absf %38 : vector<16x32xf32>
    %cst_22 = arith.constant 0.327591091 : f32
    %45 = vector.broadcast %cst_22 : f32 to vector<16x32xf32>
    %46 = arith.mulf %45, %44 : vector<16x32xf32>
    %cst_23 = arith.constant 1.000000e+00 : f32
    %47 = vector.broadcast %cst_23 : f32 to vector<16x32xf32>
    %48 = arith.addf %47, %46 : vector<16x32xf32>
    %cst_24 = arith.constant 1.000000e+00 : f32
    %49 = vector.broadcast %cst_24 : f32 to vector<16x32xf32>
    %50 = arith.divf %49, %48 : vector<16x32xf32>
    %cst_25 = arith.constant 1.06140542 : f32
    %51 = vector.broadcast %cst_25 : f32 to vector<16x32xf32>
    %52 = arith.mulf %51, %50 : vector<16x32xf32>
    %cst_26 = arith.constant -1.45315206 : f32
    %53 = vector.broadcast %cst_26 : f32 to vector<16x32xf32>
    %54 = arith.addf %52, %53 : vector<16x32xf32>
    %55 = arith.mulf %54, %50 : vector<16x32xf32>
    %cst_27 = arith.constant 1.42141378 : f32
    %56 = vector.broadcast %cst_27 : f32 to vector<16x32xf32>
    %57 = arith.addf %55, %56 : vector<16x32xf32>
    %58 = arith.mulf %57, %50 : vector<16x32xf32>
    %cst_28 = arith.constant -0.284496725 : f32
    %59 = vector.broadcast %cst_28 : f32 to vector<16x32xf32>
    %60 = arith.addf %58, %59 : vector<16x32xf32>
    %61 = arith.mulf %60, %50 : vector<16x32xf32>
    %cst_29 = arith.constant 0.254829586 : f32
    %62 = vector.broadcast %cst_29 : f32 to vector<16x32xf32>
    %63 = arith.addf %61, %62 : vector<16x32xf32>
    %64 = arith.mulf %63, %50 : vector<16x32xf32>
    %cst_30 = arith.constant 0.000000e+00 : f32
    %65 = vector.broadcast %cst_30 : f32 to vector<16x32xf32>
    %66 = arith.subf %65, %44 : vector<16x32xf32>
    %67 = arith.mulf %66, %44 : vector<16x32xf32>
    %68 = math.exp %67 : vector<16x32xf32>
    %69 = arith.mulf %64, %68 : vector<16x32xf32>
    %cst_31 = arith.constant 1.000000e+00 : f32
    %70 = vector.broadcast %cst_31 : f32 to vector<16x32xf32>
    %71 = arith.subf %70, %69 : vector<16x32xf32>
    %72 = arith.mulf %43, %71 : vector<16x32xf32>
    %cst_32 = arith.constant 1.000000e+00 : f32
    %73 = vector.broadcast %cst_32 : f32 to vector<16x32xf32>
    %74 = arith.addf %73, %72 : vector<16x32xf32>
    %75 = arith.mulf %36, %74 : vector<16x32xf32>
    %c0_33 = arith.constant 0 : index
    %c0_34 = arith.constant 0 : index
    %76 = vector.load %arg7[%c0_33, %c0_34] : memref<1x32xf32, #tpu.memory_space<vmem>>, vector<1x32xf32>
    %c0_35 = arith.constant 0 : index
    %c0_36 = arith.constant 0 : index
    %77 = vector.load %arg8[%c0_35, %c0_36] : memref<1x32xf32, #tpu.memory_space<vmem>>, vector<1x32xf32>
    %cst_37 = arith.constant dense<0.000000e+00> : vector<16xf32>
    %78 = vector.multi_reduction <add>, %75, %cst_37 [1] : vector<16x32xf32> to vector<16xf32>
    %79 = vector.shape_cast %78 : vector<16xf32> to vector<16x1xf32>
    %cst_38 = arith.constant 3.200000e+01 : f32
    %80 = vector.broadcast %cst_38 : f32 to vector<16x1xf32>
    %81 = arith.divf %79, %80 : vector<16x1xf32>
    %82 = vector.broadcast %81 : vector<16x1xf32> to vector<16x32xf32>
    %83 = arith.subf %75, %82 : vector<16x32xf32>
    %84 = arith.mulf %83, %83 : vector<16x32xf32>
    %cst_39 = arith.constant dense<0.000000e+00> : vector<16xf32>
    %85 = vector.multi_reduction <add>, %84, %cst_39 [1] : vector<16x32xf32> to vector<16xf32>
    %86 = vector.shape_cast %85 : vector<16xf32> to vector<16x1xf32>
    %cst_40 = arith.constant 3.200000e+01 : f32
    %87 = vector.broadcast %cst_40 : f32 to vector<16x1xf32>
    %88 = arith.divf %86, %87 : vector<16x1xf32>
    %89 = vector.broadcast %81 : vector<16x1xf32> to vector<16x32xf32>
    %90 = arith.subf %75, %89 : vector<16x32xf32>
    %cst_41 = arith.constant 9.99999974E-6 : f32
    %91 = vector.broadcast %cst_41 : f32 to vector<16x1xf32>
    %92 = arith.addf %88, %91 : vector<16x1xf32>
    %93 = math.rsqrt %92 : vector<16x1xf32>
    %94 = vector.broadcast %93 : vector<16x1xf32> to vector<16x32xf32>
    %95 = arith.mulf %90, %94 : vector<16x32xf32>
    %96 = vector.broadcast %76 : vector<1x32xf32> to vector<16x32xf32>
    %97 = arith.mulf %95, %96 : vector<16x32xf32>
    %98 = vector.broadcast %77 : vector<1x32xf32> to vector<16x32xf32>
    %99 = arith.addf %97, %98 : vector<16x32xf32>
    %100 = arith.truncf %99 : vector<16x32xf32> to vector<16x32xbf16>
    %c0_42 = arith.constant 0 : index
    %c0_43 = arith.constant 0 : index
    %101 = vector.load %arg9[%c0_42, %c0_43] : memref<32x32xf32, #tpu.memory_space<vmem>>, vector<32x32xf32>
    %102 = arith.truncf %101 : vector<32x32xf32> to vector<32x32xbf16>
    %cst_44 = arith.constant dense<0.000000e+00> : vector<16x32xf32>
    %103 = tpu.matmul %100, %102, %cst_44 {dimension_numbers = #tpu.dot_dimension_numbers<[1], [0], [0], [1], [0, 0, 1, 1], [], []>} : vector<16x32xbf16>, vector<32x32xbf16>, vector<16x32xf32> -> vector<16x32xf32>
    %c0_45 = arith.constant 0 : index
    %c0_46 = arith.constant 0 : index
    %104 = vector.load %arg10[%c0_45, %c0_46] : memref<1x32xf32, #tpu.memory_space<vmem>>, vector<1x32xf32>
    %105 = vector.broadcast %104 : vector<1x32xf32> to vector<16x32xf32>
    %106 = arith.addf %103, %105 : vector<16x32xf32>
    %107 = arith.truncf %106 : vector<16x32xf32> to vector<16x32xbf16>
    %cst_47 = arith.constant dense<0.000000e+00> : vector<16x16xf32>
    %108 = tpu.matmul %107, %3, %cst_47 {dimension_numbers = #tpu.dot_dimension_numbers<[1], [1], [0], [0], [0, 0, 1, 0], [], []>} : vector<16x32xbf16>, vector<16x32xbf16>, vector<16x16xf32> -> vector<16x16xf32>
    %cst_48 = arith.constant 0.176776692 : f32
    %109 = vector.broadcast %cst_48 : f32 to vector<16x16xf32>
    %110 = arith.mulf %108, %109 : vector<16x16xf32>
    %111 = vector.shape_cast %110 : vector<16x16xf32> to vector<2x8x16xf32>
    %cst_49 = arith.constant dense<0xFF800000> : vector<2x16xf32>
    %112 = vector.multi_reduction <maximumf>, %111, %cst_49 [1] : vector<2x8x16xf32> to vector<2x16xf32>
    %113 = vector.shape_cast %112 : vector<2x16xf32> to vector<2x1x16xf32>
    %114 = vector.shape_cast %112 : vector<2x16xf32> to vector<2x16x1xf32>
    %115 = vector.broadcast %113 : vector<2x1x16xf32> to vector<2x16x16xf32>
    %116 = vector.broadcast %114 : vector<2x16x1xf32> to vector<2x16x16xf32>
    %117 = arith.cmpf oge, %115, %116 : vector<2x16x16xf32>
    %118 = arith.extui %117 : vector<2x16x16xi1> to vector<2x16x16xi32>
    %119 = arith.sitofp %118 : vector<2x16x16xi32> to vector<2x16x16xf32>
    %cst_50 = arith.constant dense<0.000000e+00> : vector<2x16xf32>
    %120 = vector.multi_reduction <add>, %119, %cst_50 [2] : vector<2x16x16xf32> to vector<2x16xf32>
    %121 = vector.shape_cast %112 : vector<2x16xf32> to vector<2x1x16xf32>
    %122 = vector.broadcast %121 : vector<2x1x16xf32> to vector<2x16x16xf32>
    %123 = arith.mulf %119, %122 : vector<2x16x16xf32>
    %cst_51 = arith.constant dense<0.000000e+00> : vector<2x16xf32>
    %124 = vector.multi_reduction <add>, %123, %cst_51 [2] : vector<2x16x16xf32> to vector<2x16xf32>
    %125 = arith.mulf %120, %112 : vector<2x16xf32>
    %cst_52 = arith.constant 1.000000e+00 : f32
    %126 = vector.broadcast %cst_52 : f32 to vector<2x16xf32>
    %127 = arith.addf %126, %125 : vector<2x16xf32>
    %128 = arith.cmpf ogt, %127, %124 : vector<2x16xf32>
    %cst_53 = arith.constant 1.000000e+00 : f32
    %129 = vector.broadcast %cst_53 : f32 to vector<2x16xf32>
    %130 = arith.subf %124, %129 : vector<2x16xf32>
    %131 = arith.divf %130, %120 : vector<2x16xf32>
    %cst_54 = arith.constant 0xFF800000 : f32
    %132 = vector.broadcast %cst_54 : f32 to vector<2x16xf32>
    %133 = arith.select %128, %131, %132 : vector<2x16xi1>, vector<2x16xf32>
    %cst_55 = arith.constant dense<0xFF800000> : vector<2xf32>
    %134 = vector.multi_reduction <maximumf>, %133, %cst_55 [1] : vector<2x16xf32> to vector<2xf32>
    %135 = vector.shape_cast %134 : vector<2xf32> to vector<2x1xf32>
    %136 = vector.broadcast %135 : vector<2x1xf32> to vector<2x16xf32>
    %137 = arith.subf %112, %136 : vector<2x16xf32>
    %cst_56 = arith.constant 0.000000e+00 : f32
    %138 = vector.broadcast %cst_56 : f32 to vector<2x16xf32>
    %139 = arith.maximumf %137, %138 : vector<2x16xf32>
    %140 = arith.truncf %139 : vector<2x16xf32> to vector<2x16xbf16>
    %cst_57 = arith.constant dense<0.000000e+00> : vector<2x32xf32>
    %141 = tpu.matmul %140, %3, %cst_57 {dimension_numbers = #tpu.dot_dimension_numbers<[1], [0], [0], [1], [0, 0, 1, 1], [], []>} : vector<2x16xbf16>, vector<16x32xbf16>, vector<2x32xf32> -> vector<2x32xf32>
    %c0_58 = arith.constant 0 : index
    %c0_59 = arith.constant 0 : index
    %142 = vector.load %arg11[%c0_58, %c0_59] : memref<2x16xf32, #tpu.memory_space<vmem>>, vector<2x16xf32>
    tpu.vector_store %arg11[%c0_58, %c0_59], %139 {strides = array<i32>} : memref<2x16xf32, #tpu.memory_space<vmem>>, vector<2x16xf32>,
    %c0_60 = arith.constant 0 : index
    %c0_61 = arith.constant 0 : index
    %143 = vector.load %arg12[%c0_60, %c0_61] : memref<2x32xf32, #tpu.memory_space<vmem>>, vector<2x32xf32>
    tpu.vector_store %arg12[%c0_60, %c0_61], %141 {strides = array<i32>} : memref<2x32xf32, #tpu.memory_space<vmem>>, vector<2x32xf32>,
    return
  }
  func.func @transform_0(%arg0: i32) -> (i32, i32, i32) {
    %c0_i32 = arith.constant 0 : i32
    %c0_i32_0 = arith.constant 0 : i32
    %c0_i32_1 = arith.constant 0 : i32
    return %arg0, %c0_i32, %c0_i32_0 : i32, i32, i32
  }
  func.func @transform_1(%arg0: i32) -> (i32, i32) {
    %c0_i32 = arith.constant 0 : i32
    %c0_i32_0 = arith.constant 0 : i32
    %c0_i32_1 = arith.constant 0 : i32
    return %c0_i32, %c0_i32_0 : i32, i32
  }
  func.func @transform_2(%arg0: i32) -> (i32, i32) {
    %c0_i32 = arith.constant 0 : i32
    %c0_i32_0 = arith.constant 0 : i32
    %c0_i32_1 = arith.constant 0 : i32
    return %c0_i32, %c0_i32_0 : i32, i32
  }
  func.func @transform_3(%arg0: i32) -> (i32, i32) {
    %c0_i32 = arith.constant 0 : i32
    %c0_i32_0 = arith.constant 0 : i32
    %c0_i32_1 = arith.constant 0 : i32
    return %c0_i32, %c0_i32_0 : i32, i32
  }
  func.func @transform_4(%arg0: i32) -> (i32, i32) {
    %c0_i32 = arith.constant 0 : i32
    %c0_i32_0 = arith.constant 0 : i32
    %c0_i32_1 = arith.constant 0 : i32
    return %c0_i32, %c0_i32_0 : i32, i32
  }
  func.func @transform_5(%arg0: i32) -> (i32, i32) {
    %c0_i32 = arith.constant 0 : i32
    %c0_i32_0 = arith.constant 0 : i32
    %c0_i32_1 = arith.constant 0 : i32
    return %c0_i32, %c0_i32_0 : i32, i32
  }
  func.func @transform_6(%arg0: i32) -> (i32, i32) {
    %c0_i32 = arith.constant 0 : i32
    %c0_i32_0 = arith.constant 0 : i32
    %c0_i32_1 = arith.constant 0 : i32
    return %c0_i32, %c0_i32_0 : i32, i32
  }
  func.func @transform_7(%arg0: i32) -> (i32, i32) {
    %c0_i32 = arith.constant 0 : i32
    %c0_i32_0 = arith.constant 0 : i32
    %c0_i32_1 = arith.constant 0 : i32
    return %c0_i32, %c0_i32_0 : i32, i32
  }
  func.func @transform_8(%arg0: i32) -> (i32, i32) {
    %c0_i32 = arith.constant 0 : i32
    %c0_i32_0 = arith.constant 0 : i32
    %c0_i32_1 = arith.constant 0 : i32
    return %c0_i32, %c0_i32_0 : i32, i32
  }
  func.func @transform_9(%arg0: i32) -> (i32, i32) {
    %c0_i32 = arith.constant 0 : i32
    %c0_i32_0 = arith.constant 0 : i32
    %c0_i32_1 = arith.constant 0 : i32
    return %c0_i32, %c0_i32_0 : i32, i32
  }
  func.func @transform_10(%arg0: i32) -> (i32, i32) {
    %c0_i32 = arith.constant 0 : i32
    %c0_i32_0 = arith.constant 0 : i32
    return %arg0, %c0_i32 : i32, i32
  }
  func.func @transform_11(%arg0: i32) -> (i32, i32) {
    %c0_i32 = arith.constant 0 : i32
    %c0_i32_0 = arith.constant 0 : i32
    return %arg0, %c0_i32 : i32, i32
  }
}

</mosaic_0001>

<llo_original>
// kernel: tpu_custom_call.1
$region0: #{tpu_custom_call.1}
  #allocation0 [shape = 'u32[]', space=smem, size = 0x4, offset = 0x4, fixed_abs, tag = 'smem constant byte address 0x4 - core index']
  #allocation1 [shape = 'u32[144,128]{1,0:T(1,128)}', space=vmem, size = 0x12000, scoped, tag = 'internal scratch']
  %s0 = inlined_call_operand.hbm [shape: f32[2,8,32], index: 0, kind: input, shape index: {}]
  %s1 = inlined_call_operand.hbm [shape: f32[16,32], index: 1, kind: input, shape index: {}]
  %s2 = inlined_call_operand.vmem [shape: f32[1,32], index: 2, kind: input, shape index: {}]
  %s3 = inlined_call_operand.vmem [shape: f32[1,32], index: 3, kind: input, shape index: {}]
  %s4 = inlined_call_operand.hbm [shape: f32[32,32], index: 4, kind: input, shape index: {}]
  %s5 = inlined_call_operand.vmem [shape: f32[1,32], index: 5, kind: input, shape index: {}]
  %s6 = inlined_call_operand.vmem [shape: f32[1,32], index: 6, kind: input, shape index: {}]
  %s7 = inlined_call_operand.vmem [shape: f32[1,32], index: 7, kind: input, shape index: {}]
  %s8 = inlined_call_operand.hbm [shape: f32[32,32], index: 8, kind: input, shape index: {}]
  %s9 = inlined_call_operand.vmem [shape: f32[1,32], index: 9, kind: input, shape index: {}]
  %s10 = inlined_call_operand.hbm [shape: f32[2,16], index: 10, kind: output, shape index: {0}]
  %s11 = inlined_call_operand.hbm [shape: f32[2,32], index: 11, kind: output, shape index: {1}]
  %12 = xla_tuple %s10, %s11
  %s13 = sld [smem:[#allocation0]]
  $region74: #{tpu_custom_call.1} parent=0
    _
  %s15 = ssub.s32 1, %s13
  %s16 = scalar_select 0, %s15, %s13
  $region1: #{tpu_custom_call.1} parent=0
    #allocation2 [shape = 'u8[8192]{0}', space=vmem, size = 0x2000, scoped, tag = 'input window, operand 0, single buffered']
    #allocation3 [shape = 's32[1]{0}', space=sflag, size = 0x4, scoped, tag = 'scoped memory for tpu_custom_call.1']
    #allocation4 [shape = 's32[1]{0}', space=sflag, size = 0x4, scoped, tag = 'scoped memory for tpu_custom_call.1']
    #allocation5 [shape = 'u8[8192]{0}', space=vmem, size = 0x2000, scoped, tag = 'input window, operand 1, single buffered']
    #allocation6 [shape = 's32[1]{0}', space=sflag, size = 0x4, scoped, tag = 'scoped memory for tpu_custom_call.1']
    #allocation7 [shape = 'u8[16384]{0}', space=vmem, size = 0x4000, scoped, tag = 'input window, operand 4, single buffered']
    #allocation8 [shape = 'u8[16384]{0}', space=vmem, size = 0x4000, scoped, tag = 'input window, operand 8, single buffered']
    #allocation9 [shape = 's32[1]{0}', space=sflag, size = 0x4, scoped, tag = 'scoped memory for tpu_custom_call.1']
    #allocation10 [shape = 'u8[1024]{0}', space=vmem, size = 0x400, scoped, tag = 'output window, operand 0, single buffered']
    #allocation11 [shape = 'u8[1024]{0}', space=vmem, size = 0x400, scoped, tag = 'output window, operand 1, single buffered']
    #allocation12 [shape = 's32[1]{0}', space=sflag, size = 0x4, scoped, tag = 'scoped memory for tpu_custom_call.1']
    %17 = vsyncpa [#allocation3], 0
    %18 = vsyncpa [#allocation6], 0
    %19 = vsyncpa [#allocation9], 0
    %20 = vsyncpa [#allocation4], 0
    %21 = vsyncpa [#allocation12], 0
    // Predicated region
    $region2: #{tpu_custom_call.1} parent=1 // pred_check
      _
    $region3: #{tpu_custom_call.1} parent=1 // pred_check_branch
      %23 = sbr.rel (0) target = $region5
    $region4: #{tpu_custom_call.1} parent=1 // pred_region
      %s25 = ssub.s32 256, 256
      %26 = vsyncadd [#allocation3], %s25
      %s27 = sshll.u32 [#allocation2], 4
      %s28 = int_to_ptr.vmem [resolvable:$true] %s27
      %33 = dma.hbm_to_vmem [thread:$0]  %s0, 256, %s28, [#allocation3], 128, 128, 8
    $region5: #{tpu_custom_call.1} parent=1 // pred_fallthru
      _
    // Predicated region
    $region6: #{tpu_custom_call.1} parent=1 // pred_check
      _
    $region7: #{tpu_custom_call.1} parent=1 // pred_check_branch
      %35 = sbr.rel (0) target = $region9
    $region8: #{tpu_custom_call.1} parent=1 // pred_region
      %s37 = ssub.s32 256, 256
      %38 = vsyncadd [#allocation6], %s37
      %s39 = sshll.u32 [#allocation5], 4
      %s40 = int_to_ptr.vmem [resolvable:$true] %s39
      %45 = dma.hbm_to_vmem [thread:$0]  %s1, 256, %s40, [#allocation6], 128, 128, 8
    $region9: #{tpu_custom_call.1} parent=1 // pred_fallthru
      _
    // Predicated region
    $region10: #{tpu_custom_call.1} parent=1 // pred_check
      _
    $region11: #{tpu_custom_call.1} parent=1 // pred_check_branch
      %47 = sbr.rel (0) target = $region13
    $region12: #{tpu_custom_call.1} parent=1 // pred_region
      _
    $region13: #{tpu_custom_call.1} parent=1 // pred_fallthru
      _
    // Predicated region
    $region14: #{tpu_custom_call.1} parent=1 // pred_check
      _
    $region15: #{tpu_custom_call.1} parent=1 // pred_check_branch
      %49 = sbr.rel (0) target = $region17
    $region16: #{tpu_custom_call.1} parent=1 // pred_region
      _
    $region17: #{tpu_custom_call.1} parent=1 // pred_fallthru
      _
    // Predicated region
    $region18: #{tpu_custom_call.1} parent=1 // pred_check
      _
    $region19: #{tpu_custom_call.1} parent=1 // pred_check_branch
      %51 = sbr.rel (0) target = $region21
    $region20: #{tpu_custom_call.1} parent=1 // pred_region
      %s53 = ssub.s32 512, 512
      %54 = vsyncadd [#allocation6], %s53
      %s55 = sshll.u32 [#allocation7], 4
      %s56 = int_to_ptr.vmem [resolvable:$true] %s55
      %61 = dma.hbm_to_vmem [thread:$0]  %s4, 512, %s56, [#allocation6], 128, 128, 8
    $region21: #{tpu_custom_call.1} parent=1 // pred_fallthru
      _
    // Predicated region
    $region22: #{tpu_custom_call.1} parent=1 // pred_check
      _
    $region23: #{tpu_custom_call.1} parent=1 // pred_check_branch
      %63 = sbr.rel (0) target = $region25
    $region24: #{tpu_custom_call.1} parent=1 // pred_region
      _
    $region25: #{tpu_custom_call.1} parent=1 // pred_fallthru
      _
    // Predicated region
    $region26: #{tpu_custom_call.1} parent=1 // pred_check
      _
    $region27: #{tpu_custom_call.1} parent=1 // pred_check_branch
      %65 = sbr.rel (0) target = $region29
    $region28: #{tpu_custom_call.1} parent=1 // pred_region
      _
    $region29: #{tpu_custom_call.1} parent=1 // pred_fallthru
      _
    // Predicated region
    $region30: #{tpu_custom_call.1} parent=1 // pred_check
      _
    $region31: #{tpu_custom_call.1} parent=1 // pred_check_branch
      %67 = sbr.rel (0) target = $region33
    $region32: #{tpu_custom_call.1} parent=1 // pred_region
      _
    $region33: #{tpu_custom_call.1} parent=1 // pred_fallthru
      _
    // Predicated region
    $region34: #{tpu_custom_call.1} parent=1 // pred_check
      _
    $region35: #{tpu_custom_call.1} parent=1 // pred_check_branch
      %69 = sbr.rel (0) target = $region37
    $region36: #{tpu_custom_call.1} parent=1 // pred_region
      %s71 = ssub.s32 512, 512
      %72 = vsyncadd [#allocation9], %s71
      %s73 = sshll.u32 [#allocation8], 4
      %s74 = int_to_ptr.vmem [resolvable:$true] %s73
      %79 = dma.hbm_to_vmem [thread:$0]  %s8, 512, %s74, [#allocation9], 128, 128, 8
    $region37: #{tpu_custom_call.1} parent=1 // pred_fallthru
      _
    // Predicated region
    $region38: #{tpu_custom_call.1} parent=1 // pred_check
      _
    $region39: #{tpu_custom_call.1} parent=1 // pred_check_branch
      %81 = sbr.rel (0) target = $region41
    $region40: #{tpu_custom_call.1} parent=1 // pred_region
      _
    $region41: #{tpu_custom_call.1} parent=1 // pred_fallthru
      _
    // Predicated region
    $region42: #{tpu_custom_call.1} parent=1 // pred_check
      _
    $region43: #{tpu_custom_call.1} parent=1 // pred_check_branch
      %83 = sbr.rel (0) target = $region45
    $region44: #{tpu_custom_call.1} parent=1 // pred_region
      %84 = dma.done [#allocation3], 256
    $region45: #{tpu_custom_call.1} parent=1 // pred_fallthru
      _
    // Predicated region
    $region46: #{tpu_custom_call.1} parent=1 // pred_check
      _
    $region47: #{tpu_custom_call.1} parent=1 // pred_check_branch
      %86 = sbr.rel (0) target = $region49
    $region48: #{tpu_custom_call.1} parent=1 // pred_region
      %87 = dma.done [#allocation6], 256
    $region49: #{tpu_custom_call.1} parent=1 // pred_fallthru
      _
    // Predicated region
    $region50: #{tpu_custom_call.1} parent=1 // pred_check
      _
    $region51: #{tpu_custom_call.1} parent=1 // pred_check_branch
      %89 = sbr.rel (0) target = $region53
    $region52: #{tpu_custom_call.1} parent=1 // pred_region
      %90 = dma.done [#allocation6], 512
    $region53: #{tpu_custom_call.1} parent=1 // pred_fallthru
      _
    // Predicated region
    $region54: #{tpu_custom_call.1} parent=1 // pred_check
      _
    $region55: #{tpu_custom_call.1} parent=1 // pred_check_branch
      %92 = sbr.rel (0) target = $region57
    $region56: #{tpu_custom_call.1} parent=1 // pred_region
      %93 = dma.done [#allocation9], 512
    $region57: #{tpu_custom_call.1} parent=1 // pred_fallthru
      _
    %v95 = vld [vmem:[#allocation2] sm:$0xff]
    %v96 = vld [vmem:[#allocation2 + $0x8] sm:$0xff]
    %v97 = vld [vmem:[#allocation5] sm:$0xff]
    %v98 = vld [vmem:[#allocation5 + $0x8] sm:$0xff]
    %v99 = vpack.c.bf16 %v98, %v97
    %v100 = vld [vmem:[%s2] sm:$0x1]
    %v101 = vld [vmem:[%s3] sm:$0x1]
    %vm102 = vcmask 261120
    %v103 = vsel %vm102, %v95, 0.0
    %104 = vadd.xlane.f32.xlu0 %v103
    %v105 = vpop.xlane.xlu0 %104
    %v106 = vsel %vm102, %v96, 0.0
    %107 = vadd.xlane.f32.xlu0 %v106
    %v108 = vpop.xlane.xlu0 %107
    %v109 = vrcp.pop 32.0
    %v110 = vmul.f32 %v105, %v109
    %v111 = vmul.f32 %v108, %v109
    %v112 = vsub.f32 %v95, %v110
    %v113 = vsub.f32 %v96, %v111
    %v114 = vmul.f32 %v112, %v112
    %v115 = vmul.f32 %v113, %v113
    %v116 = vsel %vm102, %v114, 0.0
    %117 = vadd.xlane.f32.xlu0 %v116
    %v118 = vpop.xlane.xlu0 %117
    %v119 = vsel %vm102, %v115, 0.0
    %120 = vadd.xlane.f32.xlu0 %v119
    %v121 = vpop.xlane.xlu0 %120
    %v122 = vmul.f32 %v118, %v109
    %v123 = vmul.f32 %v121, %v109
    %v124 = vadd.f32 %v122, 1e-05
    %v125 = vadd.f32 %v123, 1e-05
    %v126 = vrsqrt.pop %v124
    %v127 = vrsqrt.pop %v125
    %v128 = vmul.f32 %v112, %v126
    %v129 = vmul.f32 %v113, %v127
    %v131 = vlaneseq
    %v132 = vshrl.u32 %v131, 7
    %v133 = vsub.s32 0, %v132
    %v134 = vrot.slane %v100, %v133
    %v136 = vmul.f32 %v128, %v134
    %v137 = vmul.f32 %v129, %v134
    %v139 = vlaneseq
    %v140 = vshrl.u32 %v139, 7
    %v141 = vsub.s32 0, %v140
    %v142 = vrot.slane %v101, %v141
    %v144 = vadd.f32 %v136, %v142
    %v145 = vadd.f32 %v137, %v142
    %v146 = vpack.c.bf16 %v145, %v144
    %v147 = vld [vmem:[#allocation7] sm:$0xff]
    %v148 = vld [vmem:[#allocation7 + $0x8] sm:$0xff]
    %v149 = vld [vmem:[#allocation7 + $0x10] sm:$0xff]
    %v150 = vld [vmem:[#allocation7 + $0x18] sm:$0xff]
    %v151 = vpack.c.bf16 %v148, %v147
    %v152 = vpack.c.bf16 %v150, %v149
    %v153 = vld [vmem:[%s5] sm:$0x1]
    %v155 = vlaneseq
    %v156 = vshrl.u32 %v155, 7
    %v157 = vsub.s32 0, %v156
    %v158 = vrot.slane %v153, %v157
    %v161 = vsel %vm102, %v146, 0
    %163 = vmatprep.subr.bf16.mxu0 0
    %164 = vmatpush1.bf16.msra.mxu0 0
    %165 = vmatprep.subr.bf16.mxu0 0
    %166 = vmatpush1.bf16.msra.mxu0 0
    %167 = vmatprep.subr.bf16.mxu0 0
    %168 = vmatpush1.bf16.msra.mxu0 0
    %169 = vmatprep.subr.bf16.mxu0 0
    %170 = vmatpush1.bf16.msra.mxu0 0
    %171 = vmatprep.subr.bf16.mxu0 0
    %172 = vmatpush1.bf16.msra.mxu0 0
    %173 = vmatprep.subr.bf16.mxu0 0
    %174 = vmatpush1.bf16.msra.mxu0 0
    %175 = vmatprep.subr.bf16.mxu0 0
    %176 = vmatpush1.bf16.msra.mxu0 %v152
    %177 = vmatprep.subr.bf16.mxu0 0
    %178 = vmatpush1.bf16.msra.mxu0 %v151
    %179 = vmatprep.subr.bf16.mxu0 0
    %180 = vmatpush2.bf16.msra.mxu0 0
    %181 = vmatprep.subr.bf16.mxu0 0
    %182 = vmatpush2.bf16.msra.mxu0 0
    %183 = vmatprep.subr.bf16.mxu0 0
    %184 = vmatpush2.bf16.msra.mxu0 0
    %185 = vmatprep.subr.bf16.mxu0 0
    %186 = vmatpush2.bf16.msra.mxu0 0
    %187 = vmatprep.subr.bf16.mxu0 0
    %188 = vmatpush2.bf16.msra.mxu0 0
    %189 = vmatprep.subr.bf16.mxu0 0
    %190 = vmatpush2.bf16.msra.mxu0 0
    %191 = vmatprep.subr.bf16.mxu0 0
    %192 = vmatpush2.bf16.msra.mxu0 0
    %193 = vmatprep.subr.bf16.mxu0 0
    %194 = vmatpush2.bf16.msra.mxu0 0
    %195 = vmatprep.mubr.bf16.mxu0 0
    %196 = vmatmul.mubr.bf16.gmra.mxu0 %v161
    %v197 = vpop.f32.mrf.mxu0
    %v198 = vadd.f32 %v158, %v197
    %v199 = vpop.f32.mrf.mxu0
    %v200 = vpop.f32.mrf.mxu0
    %v201 = vadd.f32 %v158, %v200
    %v202 = vpop.f32.mrf.mxu0
    %203 = vdwg.mxu0
    %v204 = vmul.f32 %v198, 0.5
    %v205 = vmul.f32 %v201, 0.5
    %v206 = vmul.f32 %v198, 0.70710677
    %v207 = vmul.f32 %v201, 0.70710677
    %vm208 = vcmp.ge.f32.partialorder %v206, 0.0
    %vm209 = vcmp.ge.f32.partialorder %v207, 0.0
    %v210 = vsel %vm208, 1.0, -1.0
    %v211 = vsel %vm209, 1.0, -1.0
    %v212 = vand.u32 2147483647, %v206
    %v213 = vand.u32 2147483647, %v207
    %v214 = vmul.f32 %v212, 0.3275911
    %v215 = vmul.f32 %v213, 0.3275911
    %v216 = vadd.f32 %v214, 1.0
    %v217 = vadd.f32 %v215, 1.0
    %v218 = vrcp.pop %v216
    %v219 = vmul.f32 1.0, %v218
    %v220 = vrcp.pop %v217
    %v221 = vmul.f32 1.0, %v220
    %v222 = vmul.f32 %v219, 1.0614054
    %v223 = vmul.f32 %v221, 1.0614054
    %v224 = vadd.f32 %v222, -1.4531521
    %v225 = vadd.f32 %v223, -1.4531521
    %v226 = vmul.f32 %v224, %v219
    %v227 = vmul.f32 %v225, %v221
    %v228 = vadd.f32 %v226, 1.4214138
    %v229 = vadd.f32 %v227, 1.4214138
    %v230 = vmul.f32 %v228, %v219
    %v231 = vmul.f32 %v229, %v221
    %v232 = vadd.f32 %v230, -0.28449672
    %v233 = vadd.f32 %v231, -0.28449672
    %v234 = vmul.f32 %v232, %v219
    %v235 = vmul.f32 %v233, %v221
    %v236 = vadd.f32 %v234, 0.2548296
    %v237 = vadd.f32 %v235, 0.2548296
    %v238 = vmul.f32 %v236, %v219
    %v239 = vmul.f32 %v237, %v221
    %v240 = vsub.f32 0.0, %v212
    %v241 = vsub.f32 0.0, %v213
    %v242 = vmul.f32 %v240, %v212
    %v243 = vmul.f32 %v241, %v213
    %v244 = vmul.f32 %v242, 1.442695
    %v245 = vpow.pop %v244
    %v246 = vmul.f32 %v243, 1.442695
    %v247 = vpow.pop %v246
    %v248 = vmul.f32 %v238, %v245
    %v249 = vmul.f32 %v239, %v247
    %v250 = vsub.f32 1.0, %v248
    %v251 = vsub.f32 1.0, %v249
    %v252 = vmul.f32 %v210, %v250
    %v253 = vmul.f32 %v211, %v251
    %v254 = vadd.f32 %v252, 1.0
    %v255 = vadd.f32 %v253, 1.0
    %v256 = vmul.f32 %v204, %v254
    %v257 = vmul.f32 %v205, %v255
    %v258 = vld [vmem:[%s6] sm:$0x1]
    %v259 = vld [vmem:[%s7] sm:$0x1]
    %v260 = vsel %vm102, %v256, 0.0
    %261 = vadd.xlane.f32.xlu0 %v260
    %v262 = vpop.xlane.xlu0 %261
    %v263 = vsel %vm102, %v257, 0.0
    %264 = vadd.xlane.f32.xlu0 %v263
    %v265 = vpop.xlane.xlu0 %264
    %v266 = vmul.f32 %v262, %v109
    %v267 = vmul.f32 %v265, %v109
    %v268 = vsub.f32 %v256, %v266
    %v269 = vsub.f32 %v257, %v267
    %v270 = vmul.f32 %v268, %v268
    %v271 = vmul.f32 %v269, %v269
    %v272 = vsel %vm102, %v270, 0.0
    %273 = vadd.xlane.f32.xlu0 %v272
    %v274 = vpop.xlane.xlu0 %273
    %v275 = vsel %vm102, %v271, 0.0
    %276 = vadd.xlane.f32.xlu0 %v275
    %v277 = vpop.xlane.xlu0 %276
    %v278 = vmul.f32 %v274, %v109
    %v279 = vmul.f32 %v277, %v109
    %v280 = vadd.f32 %v278, 1e-05
    %v281 = vadd.f32 %v279, 1e-05
    %v282 = vrsqrt.pop %v280
    %v283 = vrsqrt.pop %v281
    %v284 = vmul.f32 %v268, %v282
    %v285 = vmul.f32 %v269, %v283
    %v287 = vlaneseq
    %v288 = vshrl.u32 %v287, 7
    %v289 = vsub.s32 0, %v288
    %v290 = vrot.slane %v258, %v289
    %v292 = vmul.f32 %v284, %v290
    %v293 = vmul.f32 %v285, %v290
    %v295 = vlaneseq
    %v296 = vshrl.u32 %v295, 7
    %v297 = vsub.s32 0, %v296
    %v298 = vrot.slane %v259, %v297
    %v300 = vadd.f32 %v292, %v298
    %v301 = vadd.f32 %v293, %v298
    %v302 = vpack.c.bf16 %v301, %v300
    %v303 = vld [vmem:[#allocation8] sm:$0xff]
    %v304 = vld [vmem:[#allocation8 + $0x8] sm:$0xff]
    %v305 = vld [vmem:[#allocation8 + $0x10] sm:$0xff]
    %v306 = vld [vmem:[#allocation8 + $0x18] sm:$0xff]
    %v307 = vpack.c.bf16 %v304, %v303
    %v308 = vpack.c.bf16 %v306, %v305
    %v309 = vld [vmem:[%s9] sm:$0x1]
    %v311 = vlaneseq
    %v312 = vshrl.u32 %v311, 7
    %v313 = vsub.s32 0, %v312
    %v314 = vrot.slane %v309, %v313
    %v317 = vsel %vm102, %v302, 0
    %319 = vmatprep.subr.bf16.mxu0 0
    %320 = vmatpush1.bf16.msra.mxu0 0
    %321 = vmatprep.subr.bf16.mxu0 0
    %322 = vmatpush1.bf16.msra.mxu0 0
    %323 = vmatprep.subr.bf16.mxu0 0
    %324 = vmatpush1.bf16.msra.mxu0 0
    %325 = vmatprep.subr.bf16.mxu0 0
    %326 = vmatpush1.bf16.msra.mxu0 0
    %327 = vmatprep.subr.bf16.mxu0 0
    %328 = vmatpush1.bf16.msra.mxu0 0
    %329 = vmatprep.subr.bf16.mxu0 0
    %330 = vmatpush1.bf16.msra.mxu0 0
    %331 = vmatprep.subr.bf16.mxu0 0
    %332 = vmatpush1.bf16.msra.mxu0 %v308
    %333 = vmatprep.subr.bf16.mxu0 0
    %334 = vmatpush1.bf16.msra.mxu0 %v307
    %335 = vmatprep.subr.bf16.mxu0 0
    %336 = vmatpush2.bf16.msra.mxu0 0
    %337 = vmatprep.subr.bf16.mxu0 0
    %338 = vmatpush2.bf16.msra.mxu0 0
    %339 = vmatprep.subr.bf16.mxu0 0
    %340 = vmatpush2.bf16.msra.mxu0 0
    %341 = vmatprep.subr.bf16.mxu0 0
    %342 = vmatpush2.bf16.msra.mxu0 0
    %343 = vmatprep.subr.bf16.mxu0 0
    %344 = vmatpush2.bf16.msra.mxu0 0
    %345 = vmatprep.subr.bf16.mxu0 0
    %346 = vmatpush2.bf16.msra.mxu0 0
    %347 = vmatprep.subr.bf16.mxu0 0
    %348 = vmatpush2.bf16.msra.mxu0 0
    %349 = vmatprep.subr.bf16.mxu0 0
    %350 = vmatpush2.bf16.msra.mxu0 0
    %351 = vmatprep.mubr.bf16.mxu0 0
    %352 = vmatmul.mubr.bf16.gmra.mxu0 %v317
    %v353 = vpop.f32.mrf.mxu0
    %v354 = vadd.f32 %v314, %v353
    %v355 = vpop.f32.mrf.mxu0
    %v356 = vpop.f32.mrf.mxu0
    %v357 = vadd.f32 %v314, %v356
    %v358 = vpop.f32.mrf.mxu0
    %359 = vdwg.mxu0
    %v360 = vpack.c.bf16 %v357, %v354
    %v362 = vsel %vm102, %v360, 0
    %v365 = vsel %vm102, %v99, 0
    %367 = vmatprep.subr.bf16.mxu0 0
    %368 = vmatpush1.bf16.xpose.msra.mxu0 0
    %369 = vmatprep.subr.bf16.mxu0 0
    %370 = vmatpush1.bf16.xpose.msra.mxu0 0
    %371 = vmatprep.subr.bf16.mxu0 0
    %372 = vmatpush1.bf16.xpose.msra.mxu0 0
    %373 = vmatprep.subr.bf16.mxu0 0
    %374 = vmatpush1.bf16.xpose.msra.mxu0 0
    %375 = vmatprep.subr.bf16.mxu0 0
    %376 = vmatpush1.bf16.xpose.msra.mxu0 0
    %377 = vmatprep.subr.bf16.mxu0 0
    %378 = vmatpush1.bf16.xpose.msra.mxu0 0
    %379 = vmatprep.subr.bf16.mxu0 0
    %380 = vmatpush1.bf16.xpose.msra.mxu0 0
    %381 = vmatprep.subr.bf16.mxu0 0
    %382 = vmatpush1.bf16.xpose.msra.mxu0 %v365
    %383 = vmatprep.subr.bf16.mxu0 0
    %384 = vmatpush2.bf16.xpose.msra.mxu0 0
    %385 = vmatprep.subr.bf16.mxu0 0
    %386 = vmatpush2.bf16.xpose.msra.mxu0 0
    %387 = vmatprep.subr.bf16.mxu0 0
    %388 = vmatpush2.bf16.xpose.msra.mxu0 0
    %389 = vmatprep.subr.bf16.mxu0 0
    %390 = vmatpush2.bf16.xpose.msra.mxu0 0
    %391 = vmatprep.subr.bf16.mxu0 0
    %392 = vmatpush2.bf16.xpose.msra.mxu0 0
    %393 = vmatprep.subr.bf16.mxu0 0
    %394 = vmatpush2.bf16.xpose.msra.mxu0 0
    %395 = vmatprep.subr.bf16.mxu0 0
    %396 = vmatpush2.bf16.xpose.msra.mxu0 0
    %397 = vmatprep.subr.bf16.mxu0 0
    %398 = vmatpush2.bf16.xpose.msra.mxu0 0
    %399 = vmatprep.mubr.bf16.mxu0 0
    %400 = vmatmul.mubr.bf16.gmra.mxu0 %v362
    %v401 = vpop.f32.mrf.mxu0
    %v402 = vadd.f32 0.0, %v401
    %v403 = vpop.f32.mrf.mxu0
    %v404 = vpop.f32.mrf.mxu0
    %v405 = vadd.f32 0.0, %v404
    %v406 = vpop.f32.mrf.mxu0
    %407 = vdwg.mxu0
    %v408 = vmul.f32 %v402, 0.17677669
    %v409 = vmul.f32 %v405, 0.17677669
    %vm410 = vcmask 130048
    %v411 = vsel %vm410, %v408, -inf
    %v412 = vrot.slane %v411, 4
    %v413 = vmax.f32 %v411, %v412
    %v414 = vrot.slane %v413, 2
    %v415 = vmax.f32 %v413, %v414
    %v416 = vrot.slane %v415, 1
    %v417 = vmax.f32 %v415, %v416
    %v418 = vsel %vm410, %v409, -inf
    %v419 = vrot.slane %v418, 4
    %v420 = vmax.f32 %v418, %v419
    %v421 = vrot.slane %v420, 2
    %v422 = vmax.f32 %v420, %v421
    %v423 = vrot.slane %v422, 1
    %v424 = vmax.f32 %v422, %v423
    %426 = vbcast.lane.b32.xlu0 %v417, 256
    %v427 = vpop.permute.xlu0 %426
    %s429 = sor.u32 256, 8
    %430 = vbcast.lane.b32.xlu0 %v417, %s429
    %v431 = vpop.permute.xlu0 %430
    %433 = vbcast.lane.b32.xlu0 %v424, 256
    %v434 = vpop.permute.xlu0 %433
    %s436 = sor.u32 256, 8
    %437 = vbcast.lane.b32.xlu0 %v424, %s436
    %v438 = vpop.permute.xlu0 %437
    %vm439 = vcmp.ge.f32.partialorder %v417, %v427
    %vm440 = vcmp.ge.f32.partialorder %v417, %v431
    %vm441 = vcmp.ge.f32.partialorder %v424, %v434
    %vm442 = vcmp.ge.f32.partialorder %v424, %v438
    %v443 = vsel %vm439, 1, 0
    %v444 = vsel %vm440, 1, 0
    %v445 = vsel %vm441, 1, 0
    %v446 = vsel %vm442, 1, 0
    %v447 = vcvt.s32.f32 %v443
    %v448 = vcvt.s32.f32 %v444
    %v449 = vcvt.s32.f32 %v445
    %v450 = vcvt.s32.f32 %v446
    %v451 = vsel %vm410, %v447, 0.0
    %452 = vadd.xlane.f32.xlu0 %v451
    %v453 = vpop.xlane.xlu0 %452
    %v454 = vsel %vm410, %v448, 0.0
    %455 = vadd.xlane.f32.xlu0 %v454
    %v456 = vpop.xlane.xlu0 %455
    %v457 = vsel %vm410, %v449, 0.0
    %458 = vadd.xlane.f32.xlu0 %v457
    %v459 = vpop.xlane.xlu0 %458
    %v460 = vsel %vm410, %v450, 0.0
    %461 = vadd.xlane.f32.xlu0 %v460
    %v462 = vpop.xlane.xlu0 %461
    %v463 = vmul.f32 %v447, %v417
    %v464 = vmul.f32 %v448, %v417
    %v465 = vmul.f32 %v449, %v424
    %v466 = vmul.f32 %v450, %v424
    %v467 = vsel %vm410, %v463, 0.0
    %468 = vadd.xlane.f32.xlu0 %v467
    %v469 = vpop.xlane.xlu0 %468
    %v470 = vsel %vm410, %v464, 0.0
    %471 = vadd.xlane.f32.xlu0 %v470
    %v472 = vpop.xlane.xlu0 %471
    %v473 = vsel %vm410, %v465, 0.0
    %474 = vadd.xlane.f32.xlu0 %v473
    %v475 = vpop.xlane.xlu0 %474
    %v476 = vsel %vm410, %v466, 0.0
    %477 = vadd.xlane.f32.xlu0 %v476
    %v478 = vpop.xlane.xlu0 %477
    %482 = vbcast.lane.b32.xlu0 %v417, 256
    %v483 = vpop.permute.xlu0 %482
    %s485 = sor.u32 256, 8
    %486 = vbcast.lane.b32.xlu0 %v417, %s485
    %v487 = vpop.permute.xlu0 %486
    %489 = vbcast.lane.b32.xlu0 %v424, 256
    %v490 = vpop.permute.xlu0 %489
    %s492 = sor.u32 256, 8
    %493 = vbcast.lane.b32.xlu0 %v424, %s492
    %v494 = vpop.permute.xlu0 %493
    %v499 = vmul.f32 %v453, %v483
    %v500 = vmul.f32 %v456, %v487
    %v501 = vmul.f32 %v459, %v490
    %v502 = vmul.f32 %v462, %v494
    %v503 = vadd.f32 %v499, 1.0
    %v504 = vadd.f32 %v500, 1.0
    %v505 = vadd.f32 %v501, 1.0
    %v506 = vadd.f32 %v502, 1.0
    %vm507 = vcmp.gt.f32.partialorder %v503, %v469
    %vm508 = vcmp.gt.f32.partialorder %v504, %v472
    %vm509 = vcmp.gt.f32.partialorder %v505, %v475
    %vm510 = vcmp.gt.f32.partialorder %v506, %v478
    %v511 = vsub.f32 %v469, 1.0
    %v512 = vsub.f32 %v472, 1.0
    %v513 = vsub.f32 %v475, 1.0
    %v514 = vsub.f32 %v478, 1.0
    %v515 = vrcp.pop %v453
    %v516 = vmul.f32 %v511, %v515
    %v517 = vrcp.pop %v456
    %v518 = vmul.f32 %v512, %v517
    %v519 = vrcp.pop %v459
    %v520 = vmul.f32 %v513, %v519
    %v521 = vrcp.pop %v462
    %v522 = vmul.f32 %v514, %v521
    %v523 = vsel %vm507, %v516, -inf
    %v524 = vsel %vm508, %v518, -inf
    %v525 = vsel %vm509, %v520, -inf
    %v526 = vsel %vm510, %v522, -inf
    %531 = vset.pattern.permute.xlu0 0
    %532 = vperm.xlu0 %531, %v523
    %v533 = vpop.permute.xlu0 %532
    %534 = vset.pattern.permute.xlu0 0
    %535 = vperm.xlu0 %534, %v524
    %v536 = vpop.permute.xlu0 %535
    %537 = vset.pattern.permute.xlu0 0
    %538 = vperm.xlu0 %537, %v525
    %v539 = vpop.permute.xlu0 %538
    %540 = vset.pattern.permute.xlu0 0
    %541 = vperm.xlu0 %540, %v526
    %v542 = vpop.permute.xlu0 %541
    %v543 = vlaneseq
    %v544 = vand.u32 %v543, 127
    %v545 = vlaneseq
    %v546 = vshrl.u32 %v545, 7
    %v547 = vsub.s32 %v544, %v546
    %v548 = vrot.slane %v533, %v547
    %v549 = vadd.s32 %v544, 4294967288
    %v550 = vlaneseq
    %v551 = vshrl.u32 %v550, 7
    %v552 = vsub.s32 %v549, %v551
    %v553 = vrot.slane %v536, %v552
    %vm554 = vcmask 130112
    %v555 = vsel %vm554, %v553, %v548
    %v556 = vlaneseq
    %v557 = vshrl.u32 %v556, 7
    %v558 = vsub.s32 %v544, %v557
    %v559 = vrot.slane %v539, %v558
    %v560 = vlaneseq
    %v561 = vshrl.u32 %v560, 7
    %v562 = vsub.s32 %v549, %v561
    %v563 = vrot.slane %v542, %v562
    %v564 = vsel %vm554, %v563, %v559
    %vm565 = vcmask 1041409
    %v566 = vsel %vm565, %v564, %v555
    %vm568 = vcmask 123904
    %v569 = vsel %vm568, %v566, -inf
    %570 = vmax.xlane.f32.xlu0 %v569
    %v571 = vpop.xlane.xlu0 %570
    %v573 = vrot.slane %v571, 1
    %v576 = vsub.f32 %v417, %v571
    %v577 = vsub.f32 %v424, %v573
    %v578 = vmax.f32 %v576, 0.0
    %v579 = vmax.f32 %v577, 0.0
    %v580 = vpack.c.bf16 %v578, %v578
    %v581 = vpack.c.bf16 %v579, %v579
    %v584 = vunpack.c.l.b16 %v580
    %v585 = vunpack.c.l.b16 %v581
    %v586 = vrot.slane %v585, 7
    %v587 = vsel %vm565, %v586, %v584
    %v588 = vpack.c.b16 %v587, %v587
    %v590 = vsel %vm410, %v588, 0
    %592 = vmatprep.subr.bf16.mxu0 0
    %593 = vmatpush1.bf16.msra.mxu0 0
    %594 = vmatprep.subr.bf16.mxu0 0
    %595 = vmatpush1.bf16.msra.mxu0 0
    %596 = vmatprep.subr.bf16.mxu0 0
    %597 = vmatpush1.bf16.msra.mxu0 0
    %598 = vmatprep.subr.bf16.mxu0 0
    %599 = vmatpush1.bf16.msra.mxu0 0
    %600 = vmatprep.subr.bf16.mxu0 0
    %601 = vmatpush1.bf16.msra.mxu0 0
    %602 = vmatprep.subr.bf16.mxu0 0
    %603 = vmatpush1.bf16.msra.mxu0 0
    %604 = vmatprep.subr.bf16.mxu0 0
    %605 = vmatpush1.bf16.msra.mxu0 0
    %606 = vmatprep.subr.bf16.mxu0 0
    %607 = vmatpush1.bf16.msra.mxu0 %v99
    %608 = vmatprep.subr.bf16.mxu0 0
    %609 = vmatpush2.bf16.msra.mxu0 0
    %610 = vmatprep.subr.bf16.mxu0 0
    %611 = vmatpush2.bf16.msra.mxu0 0
    %612 = vmatprep.subr.bf16.mxu0 0
    %613 = vmatpush2.bf16.msra.mxu0 0
    %614 = vmatprep.subr.bf16.mxu0 0
    %615 = vmatpush2.bf16.msra.mxu0 0
    %616 = vmatprep.subr.bf16.mxu0 0
    %617 = vmatpush2.bf16.msra.mxu0 0
    %618 = vmatprep.subr.bf16.mxu0 0
    %619 = vmatpush2.bf16.msra.mxu0 0
    %620 = vmatprep.subr.bf16.mxu0 0
    %621 = vmatpush2.bf16.msra.mxu0 0
    %622 = vmatprep.subr.bf16.mxu0 0
    %623 = vmatpush2.bf16.msra.mxu0 0
    %624 = vmatprep.mubr.bf16.mxu0 0
    %625 = vmatmul.mubr.bf16.gmra.mxu0 %v590
    %v626 = vpop.f32.mrf.mxu0
    %v627 = vadd.f32 0.0, %v626
    %v628 = vpop.f32.mrf.mxu0
    %v629 = vpop.f32.mrf.mxu0
    %v630 = vpop.f32.mrf.mxu0
    %631 = vdwg.mxu0
    %v634 = vrot.slane %v579, 7
    %v635 = vsel %vm565, %v634, %v578
    %637 = vst.msk [vmem:[#allocation10] sm:$0x3] %vm568, %v635
    %vm638 = vcmask 254976
    %639 = vst.msk [vmem:[#allocation11] sm:$0x3] %vm638, %v627
    // Predicated region
    $region58: #{tpu_custom_call.1} parent=1 // pred_check
      _
    $region59: #{tpu_custom_call.1} parent=1 // pred_check_branch
      %641 = sbr.rel (0) target = $region61
    $region60: #{tpu_custom_call.1} parent=1 // pred_region
      %s643 = ssub.s32 32, 32
      %644 = vsyncadd [#allocation4], %s643
      %s646 = sshll.u32 [#allocation10], 4
      %s647 = int_to_ptr.vmem [resolvable:$true] %s646
      %649 = dma.vmem_to_hbm [thread:$0]  %s647, 32, %s10, [#allocation4]
    $region61: #{tpu_custom_call.1} parent=1 // pred_fallthru
      _
    // Predicated region
    $region62: #{tpu_custom_call.1} parent=1 // pred_check
      _
    $region63: #{tpu_custom_call.1} parent=1 // pred_check_branch
      %651 = sbr.rel (0) target = $region65
    $region64: #{tpu_custom_call.1} parent=1 // pred_region
      %s653 = ssub.s32 32, 32
      %654 = vsyncadd [#allocation12], %s653
      %s656 = sshll.u32 [#allocation11], 4
      %s657 = int_to_ptr.vmem [resolvable:$true] %s656
      %659 = dma.vmem_to_hbm [thread:$0]  %s657, 32, %s11, [#allocation12]
    $region65: #{tpu_custom_call.1} parent=1 // pred_fallthru
      _
    // Predicated region
    $region66: #{tpu_custom_call.1} parent=1 // pred_check
      _
    $region67: #{tpu_custom_call.1} parent=1 // pred_check_branch
      %661 = sbr.rel (0) target = $region69
    $region68: #{tpu_custom_call.1} parent=1 // pred_region
      %662 = dma.done [#allocation4], 32
    $region69: #{tpu_custom_call.1} parent=1 // pred_fallthru
      _
    // Predicated region
    $region70: #{tpu_custom_call.1} parent=1 // pred_check
      _
    $region71: #{tpu_custom_call.1} parent=1 // pred_check_branch
      %664 = sbr.rel (0) target = $region73
    $region72: #{tpu_custom_call.1} parent=1 // pred_region
      %665 = dma.done [#allocation12], 32
    $region73: #{tpu_custom_call.1} parent=1 // pred_fallthru
      _
    %666 = vsyncpa [#allocation3], 1
    %667 = vsyncpa [#allocation6], 1
    %668 = vsyncpa [#allocation9], 1
    %669 = vsyncpa [#allocation4], 1
    %670 = vsyncpa [#allocation12], 1

</llo_original>
